<compile_context>
chip_gen: v5e
topology: v5e:2x2
jax: 0.10.0
libtpu: 0.0.40
codegen_flags: <defaults>
</compile_context>

<pallas_src>
import jax
import jax.numpy as jnp
from jax import lax
from jax.experimental import pallas as pl
from jax.experimental.pallas import tpu as pltpu

LANES = 128
ACC_ROWS = 256        # fixed accumulator height (multiple of 8/16 sublanes)
MAX_TILE_ROWS = 8192  # 8192 * 128 * 4 B = 4 MiB per f32 input tile


def _loss_kernel(params_ref, n_ref, sim_ref, lev_ref, out_ref):
    """params_ref: SMEM (2,) f32 [alpha/4, beta/2]; n_ref: SMEM (1,) i32 true count.
    sim_ref / lev_ref: VMEM (tile_rows, 128) tiles.
    out_ref: VMEM (acc_rows, 128) f32 partial-sum accumulator; one resident
    block per leading ("parallel") grid index, reduced & divided by n in the
    wrapper."""
    p = pl.program_id(0)
    i = pl.program_id(1)
    inner = pl.num_programs(1)
    tile_rows, lanes = sim_ref.shape
    acc_rows = out_ref.shape[0]
    tile_elems = tile_rows * lanes

    @pl.when(i == 0)
    def _():
        out_ref[...] = jnp.zeros_like(out_ref)

    alpha_quarter = params_ref[0]   # alpha / 4
    beta_half = params_ref[1]       # beta / 2

    s = jnp.clip(sim_ref[...].astype(jnp.float32), -0.99, 0.99)
    # Exact divide (clip keeps 1+s in [0.01, 1.99], and accuracy stays at f32).
    r = (1.0 - s) / (1.0 + s)
    t = alpha_quarter * jnp.log(r) - beta_half
    # 1/(1+exp(x)) == 0.5 - 0.5*tanh(x/2); tanh saturates so no +-80 clip needed.
    pseudo = 0.5 - 0.5 * jnp.tanh(t)
    diff = pseudo - lev_ref[...].astype(jnp.float32)
    sq = diff * diff

    # Remaining valid elements at the start of this *logical* tile.
    # (i32 scalar math; fine for < 2^31 total elements.)
    rem = n_ref[0] - (p * inner + i) * tile_elems

    def accumulate(vals):
        if tile_rows == acc_rows:
            out_ref[...] += vals
        else:
            # tile_rows is a static multiple of acc_rows (both multiples of 256),
            # so this reshape is layout-free; sum(axis=0) is plain VALU adds.
            out_ref[...] += vals.reshape(tile_rows // acc_rows, acc_rows,
                                         lanes).sum(axis=0)

    @pl.when(rem >= tile_elems)          # interior tile: no masking needed
    def _():
        accumulate(sq)

    @pl.when(rem < tile_elems)           # tail / duplicate tile: mask padding
    def _():
        flat_idx = (lax.broadcasted_iota(jnp.int32, (tile_rows, lanes), 0) * lanes
                    + lax.broadcasted_iota(jnp.int32, (tile_rows, lanes), 1))
        accumulate(jnp.where(flat_idx < rem, sq, 0.0))


def mse_levenshtein_loss(similarities, levs, alpha, beta):
    """Returns scalar f32 loss = MSE(pseudo_lev(similarities), levs)."""
    sim_flat = jnp.ravel(similarities)
    lev_flat = jnp.ravel(levs)
    n = sim_flat.shape[0]

    rows_exact = pl.cdiv(n, LANES)
    if rows_exact <= ACC_ROWS:
        # Single small block: full-dim block shape (always legal), acc == tile.
        rows = rows_exact
        tile_rows = rows
        acc_rows = rows
    else:
        # Round rows to a multiple of ACC_ROWS so tile_rows (a multiple of 256)
        # never exceeds the array and divides cleanly by the accumulator.
        rows = ((rows_exact + ACC_ROWS - 1) // ACC_ROWS) * ACC_ROWS
        tile_rows = min(MAX_TILE_ROWS, rows)
        acc_rows = ACC_ROWS

    total = rows * LANES
    if total != n:
        # Pad only to the tiling boundary; padded values are masked in-kernel.
        sim_flat = jnp.pad(sim_flat, (0, total - n))
        lev_flat = jnp.pad(lev_flat, (0, total - n))
    sim2d = sim_flat.reshape(rows, LANES)
    lev2d = lev_flat.reshape(rows, LANES)

    nblocks = pl.cdiv(rows, tile_rows)
    num_splits = 2 if nblocks >= 2 else 1    # both TCs on v7x; harmless elsewhere
    inner = pl.cdiv(nblocks, num_splits)

    def tile_map(p, i):
        # Clamp so a trailing duplicate block of the second split never DMAs
        # out of bounds; its contribution is masked to zero in the kernel.
        return (jnp.minimum(p * inner + i, nblocks - 1), 0)

    params = jnp.stack([alpha * 0.25, beta * 0.5]).astype(jnp.float32)
    n_arr = jnp.array([n], dtype=jnp.int32)

    in_bytes = n * (sim2d.dtype.itemsize + lev2d.dtype.itemsize)
    out_bytes = num_splits * acc_rows * LANES * 4
    cost = pl.CostEstimate(
        flops=12 * n,
        transcendentals=3 * n,            # divide-recip, log, tanh
        bytes_accessed=in_bytes + out_bytes,
    )

    partials = pl.pallas_call(
        _loss_kernel,
        out_shape=jax.ShapeDtypeStruct((num_splits, acc_rows, LANES), jnp.float32),
        grid_spec=pltpu.PrefetchScalarGridSpec(
            num_scalar_prefetch=0,
            grid=(num_splits, inner),
            in_specs=[
                pl.BlockSpec(memory_space=pltpu.SMEM),            # [alpha/4, beta/2]
                pl.BlockSpec(memory_space=pltpu.SMEM),            # n (true count)
                pl.BlockSpec((tile_rows, LANES), tile_map),       # sim tile
                pl.BlockSpec((tile_rows, LANES), tile_map),       # lev tile
            ],
            out_specs=pl.BlockSpec((None, acc_rows, LANES),
                                   lambda p, i: (p, 0, 0)),
        ),
        compiler_params=pltpu.CompilerParams(
            dimension_semantics=("parallel", "arbitrary"),
            vmem_limit_bytes=32 << 20),
        cost_estimate=cost,
    )(params, n_arr, sim2d, lev2d)

    return jnp.sum(partials) / jnp.float32(n)


def _reference(similarities, levs, alpha, beta):
    # Literal translation of the PyTorch module (exp/sigmoid form, with clips).
    s = jnp.clip(jnp.ravel(similarities).astype(jnp.float32), -0.99, 0.99)
    x = jnp.clip(alpha * jnp.log((1.0 - s) / (1.0 + s)) / 2.0 - beta, -80.0, 80.0)
    pseudo = 1.0 / (1.0 + jnp.exp(x))
    return jnp.mean((pseudo - jnp.ravel(levs).astype(jnp.float32)) ** 2)


if __name__ == "__main__":
    key = jax.random.PRNGKey(0)
    k1, k2, k3, k4, k5, k6, k7, k8 = jax.random.split(key, 8)

    # Module-default parameters.
    alpha = jnp.float32(8.0)
    beta = jnp.float32(-7.0)

    # 1) Small lane-aligned test: cosine-like sims, lev ratios.
    sim = jax.random.uniform(k1, (2, 4, 16, 16), jnp.float32, -1.0, 1.0)
    lev = jax.random.uniform(k2, (2, 4, 16, 16), jnp.float32, 0.0, 1.0)
    loss = jax.block_until_ready(mse_levenshtein_loss(sim, lev, alpha, beta))
    ref = jax.block_until_ready(_reference(sim, lev, alpha, beta))
    assert jnp.allclose(loss, ref, rtol=2e-5, atol=1e-6), (loss, ref)

    # 2) Ragged count (300 % 128 != 0): exercises the in-kernel tail mask.
    sim2 = jax.random.uniform(k3, (3, 100), jnp.float32, -1.0, 1.0)
    lev2 = jax.random.uniform(k4, (3, 100), jnp.float32, 0.0, 1.0)
    loss2 = jax.block_until_ready(mse_levenshtein_loss(sim2, lev2, alpha, beta))
    ref2 = jax.block_until_ready(_reference(sim2, lev2, alpha, beta))
    assert jnp.allclose(loss2, ref2, rtol=2e-5, atol=1e-6), (loss2, ref2)

    # 3) Single large block (chunked accumulator + tail mask, one grid step).
    sim3 = jax.random.uniform(k5, (520, 520), jnp.float32, -1.0, 1.0)
    lev3 = jax.random.uniform(k6, (520, 520), jnp.float32, 0.0, 1.0)
    loss3 = jax.block_until_ready(mse_levenshtein_loss(sim3, lev3, alpha, beta))
    ref3 = jax.block_until_ready(_reference(sim3, lev3, alpha, beta))
    assert jnp.allclose(loss3, ref3, rtol=5e-5, atol=1e-6), (loss3, ref3)

    # 4) Multi-block (odd block count): both splits do real work, one partial
    #    boundary block, and one fully-masked duplicate block on split 1.
    sim4 = jax.random.uniform(k7, (1536, 1536), jnp.float32, -1.0, 1.0)
    lev4 = jax.random.uniform(k8, (1536, 1536), jnp.float32, 0.0, 1.0)
    loss4 = jax.block_until_ready(mse_levenshtein_loss(sim4, lev4, alpha, beta))
    ref4 = jax.block_until_ready(_reference(sim4, lev4, alpha, beta))
    assert jnp.allclose(loss4, ref4, rtol=5e-5, atol=1e-6), (loss4, ref4)

    print("KERNEL_OK")
</pallas_src>

<mosaic_0001>
module attributes {stable_mosaic.version = 11 : i64} {
  func.func @_loss_kernel(%arg0: i32, %arg1: i32, %arg2: memref<2xf32, #tpu.memory_space<smem>>, %arg3: memref<1xi32, #tpu.memory_space<smem>>, %arg4: memref<16x128xf32, #tpu.memory_space<vmem>>, %arg5: memref<16x128xf32, #tpu.memory_space<vmem>>, %arg6: memref<1x16x128xf32, #tpu.memory_space<vmem>>) attributes {dimension_semantics = [#tpu.dimension_semantics<parallel>, #tpu.dimension_semantics<arbitrary>], iteration_bounds = array<i64: 1, 1>, scalar_prefetch = 0 : i64, scratch_operands = 0 : i64, tpu.core_type = #tpu.core_type<tc>, window_params = [{transform_indices = @transform_0, window_bounds = array<i64: 2>}, {transform_indices = @transform_1, window_bounds = array<i64: 1>}, {transform_indices = @transform_2, window_bounds = array<i64: 16, 128>}, {transform_indices = @transform_3, window_bounds = array<i64: 16, 128>}, {transform_indices = @transform_4, window_bounds = array<i64: 1, 16, 128>}]} {
    %c0_i32 = arith.constant 0 : i32
    %0 = arith.cmpi eq, %arg1, %c0_i32 : i32
    %1 = arith.extui %0 : i1 to i32
    %c0_i32_0 = arith.constant 0 : i32
    %2 = arith.cmpi ne, %1, %c0_i32_0 : i32
    scf.if %2 {
      %cst_15 = arith.constant 0.000000e+00 : f32
      %39 = vector.broadcast %cst_15 : f32 to vector<16x128xf32>
      %c0_16 = arith.constant 0 : index
      %c0_17 = arith.constant 0 : index
      %c0_18 = arith.constant 0 : index
      %40 = vector.load %arg6[%c0_16, %c0_17, %c0_18] : memref<1x16x128xf32, #tpu.memory_space<vmem>>, vector<1x16x128xf32>
      %41 = vector.shape_cast %40 : vector<1x16x128xf32> to vector<16x128xf32>
      %42 = vector.shape_cast %39 : vector<16x128xf32> to vector<1x16x128xf32>
      tpu.vector_store %arg6[%c0_16, %c0_17, %c0_18], %42 {strides = array<i32>} : memref<1x16x128xf32, #tpu.memory_space<vmem>>, vector<1x16x128xf32>,
    } else {
    }
    %c0 = arith.constant 0 : index
    %3 = memref.load %arg2[%c0] : memref<2xf32, #tpu.memory_space<smem>>
    %c1 = arith.constant 1 : index
    %4 = memref.load %arg2[%c1] : memref<2xf32, #tpu.memory_space<smem>>
    %c0_1 = arith.constant 0 : index
    %c0_2 = arith.constant 0 : index
    %5 = vector.load %arg4[%c0_1, %c0_2] : memref<16x128xf32, #tpu.memory_space<vmem>>, vector<16x128xf32>
    %cst = arith.constant -9.900000e-01 : f32
    %cst_3 = arith.constant 9.900000e-01 : f32
    %6 = vector.broadcast %cst : f32 to vector<16x128xf32>
    %7 = arith.maximumf %6, %5 : vector<16x128xf32>
    %8 = vector.broadcast %cst_3 : f32 to vector<16x128xf32>
    %9 = arith.minimumf %8, %7 : vector<16x128xf32>
    %cst_4 = arith.constant 1.000000e+00 : f32
    %10 = vector.broadcast %cst_4 : f32 to vector<16x128xf32>
    %11 = arith.subf %10, %9 : vector<16x128xf32>
    %cst_5 = arith.constant 1.000000e+00 : f32
    %12 = vector.broadcast %cst_5 : f32 to vector<16x128xf32>
    %13 = arith.addf %12, %9 : vector<16x128xf32>
    %14 = arith.divf %11, %13 : vector<16x128xf32>
    %15 = math.log %14 : vector<16x128xf32>
    %16 = vector.broadcast %3 : f32 to vector<16x128xf32>
    %17 = arith.mulf %16, %15 : vector<16x128xf32>
    %18 = vector.broadcast %4 : f32 to vector<16x128xf32>
    %19 = arith.subf %17, %18 : vector<16x128xf32>
    %20 = math.tanh %19 : vector<16x128xf32>
    %cst_6 = arith.constant 5.000000e-01 : f32
    %21 = vector.broadcast %cst_6 : f32 to vector<16x128xf32>
    %22 = arith.mulf %21, %20 : vector<16x128xf32>
    %cst_7 = arith.constant 5.000000e-01 : f32
    %23 = vector.broadcast %cst_7 : f32 to vector<16x128xf32>
    %24 = arith.subf %23, %22 : vector<16x128xf32>
    %c0_8 = arith.constant 0 : index
    %c0_9 = arith.constant 0 : index
    %25 = vector.load %arg5[%c0_8, %c0_9] : memref<16x128xf32, #tpu.memory_space<vmem>>, vector<16x128xf32>
    %26 = arith.subf %24, %25 : vector<16x128xf32>
    %27 = arith.mulf %26, %26 : vector<16x128xf32>
    %c0_10 = arith.constant 0 : index
    %28 = memref.load %arg3[%c0_10] : memref<1xi32, #tpu.memory_space<smem>>
    %c1_i32 = arith.constant 1 : i32
    %29 = arith.muli %arg0, %c1_i32 : i32
    %30 = arith.addi %29, %arg1 : i32
    %c2048_i32 = arith.constant 2048 : i32
    %31 = arith.muli %30, %c2048_i32 : i32
    %32 = arith.subi %28, %31 : i32
    %c2048_i32_11 = arith.constant 2048 : i32
    %33 = arith.cmpi sge, %32, %c2048_i32_11 : i32
    %34 = arith.extui %33 : i1 to i32
    %c0_i32_12 = arith.constant 0 : i32
    %35 = arith.cmpi ne, %34, %c0_i32_12 : i32
    scf.if %35 {
      %c0_15 = arith.constant 0 : index
      %c0_16 = arith.constant 0 : index
      %c0_17 = arith.constant 0 : index
      %39 = vector.load %arg6[%c0_15, %c0_16, %c0_17] : memref<1x16x128xf32, #tpu.memory_space<vmem>>, vector<1x16x128xf32>
      %40 = vector.shape_cast %39 : vector<1x16x128xf32> to vector<16x128xf32>
      %41 = arith.addf %40, %27 : vector<16x128xf32>
      %c0_18 = arith.constant 0 : index
      %c0_19 = arith.constant 0 : index
      %c0_20 = arith.constant 0 : index
      %42 = vector.load %arg6[%c0_18, %c0_19, %c0_20] : memref<1x16x128xf32, #tpu.memory_space<vmem>>, vector<1x16x128xf32>
      %43 = vector.shape_cast %42 : vector<1x16x128xf32> to vector<16x128xf32>
      %44 = vector.shape_cast %41 : vector<16x128xf32> to vector<1x16x128xf32>
      tpu.vector_store %arg6[%c0_18, %c0_19, %c0_20], %44 {strides = array<i32>} : memref<1x16x128xf32, #tpu.memory_space<vmem>>, vector<1x16x128xf32>,
    } else {
    }
    %c2048_i32_13 = arith.constant 2048 : i32
    %36 = arith.cmpi slt, %32, %c2048_i32_13 : i32
    %37 = arith.extui %36 : i1 to i32
    %c0_i32_14 = arith.constant 0 : i32
    %38 = arith.cmpi ne, %37, %c0_i32_14 : i32
    scf.if %38 {
      %39 = tpu.iota {dimensions = array<i32: 0>} : vector<16x128xi32>
      %c128_i32 = arith.constant 128 : i32
      %40 = vector.broadcast %c128_i32 : i32 to vector<16x128xi32>
      %41 = arith.muli %39, %40 : vector<16x128xi32>
      %42 = tpu.iota {dimensions = array<i32: 1>} : vector<16x128xi32>
      %43 = arith.addi %41, %42 : vector<16x128xi32>
      %44 = vector.broadcast %32 : i32 to vector<16x128xi32>
      %45 = arith.cmpi slt, %43, %44 : vector<16x128xi32>
      %cst_15 = arith.constant 0.000000e+00 : f32
      %46 = vector.broadcast %cst_15 : f32 to vector<16x128xf32>
      %47 = arith.select %45, %27, %46 : vector<16x128xi1>, vector<16x128xf32>
      %c0_16 = arith.constant 0 : index
      %c0_17 = arith.constant 0 : index
      %c0_18 = arith.constant 0 : index
      %48 = vector.load %arg6[%c0_16, %c0_17, %c0_18] : memref<1x16x128xf32, #tpu.memory_space<vmem>>, vector<1x16x128xf32>
      %49 = vector.shape_cast %48 : vector<1x16x128xf32> to vector<16x128xf32>
      %50 = arith.addf %49, %47 : vector<16x128xf32>
      %c0_19 = arith.constant 0 : index
      %c0_20 = arith.constant 0 : index
      %c0_21 = arith.constant 0 : index
      %51 = vector.load %arg6[%c0_19, %c0_20, %c0_21] : memref<1x16x128xf32, #tpu.memory_space<vmem>>, vector<1x16x128xf32>
      %52 = vector.shape_cast %51 : vector<1x16x128xf32> to vector<16x128xf32>
      %53 = vector.shape_cast %50 : vector<16x128xf32> to vector<1x16x128xf32>
      tpu.vector_store %arg6[%c0_19, %c0_20, %c0_21], %53 {strides = array<i32>} : memref<1x16x128xf32, #tpu.memory_space<vmem>>, vector<1x16x128xf32>,
    } else {
    }
    return
  }
  func.func @transform_0(%arg0: i32, %arg1: i32) -> i32 {
    %c0_i32 = arith.constant 0 : i32
    %c0_i32_0 = arith.constant 0 : i32
    return %c0_i32 : i32
  }
  func.func @transform_1(%arg0: i32, %arg1: i32) -> i32 {
    %c0_i32 = arith.constant 0 : i32
    %c0_i32_0 = arith.constant 0 : i32
    return %c0_i32 : i32
  }
  func.func @transform_2(%arg0: i32, %arg1: i32) -> (i32, i32) {
    %c1_i32 = arith.constant 1 : i32
    %0 = arith.muli %arg0, %c1_i32 : i32
    %1 = arith.addi %0, %arg1 : i32
    %c0_i32 = arith.constant 0 : i32
    %2 = arith.minsi %1, %c0_i32 : i32
    %c0_i32_0 = arith.constant 0 : i32
    %c0_i32_1 = arith.constant 0 : i32
    return %2, %c0_i32_0 : i32, i32
  }
  func.func @transform_3(%arg0: i32, %arg1: i32) -> (i32, i32) {
    %c1_i32 = arith.constant 1 : i32
    %0 = arith.muli %arg0, %c1_i32 : i32
    %1 = arith.addi %0, %arg1 : i32
    %c0_i32 = arith.constant 0 : i32
    %2 = arith.minsi %1, %c0_i32 : i32
    %c0_i32_0 = arith.constant 0 : i32
    %c0_i32_1 = arith.constant 0 : i32
    return %2, %c0_i32_0 : i32, i32
  }
  func.func @transform_4(%arg0: i32, %arg1: i32) -> (i32, i32, i32) {
    %c0_i32 = arith.constant 0 : i32
    %c0_i32_0 = arith.constant 0 : i32
    %c0_i32_1 = arith.constant 0 : i32
    return %arg0, %c0_i32, %c0_i32_0 : i32, i32, i32
  }
}

</mosaic_0001>

<llo_original>
// kernel: tpu_custom_call.1
$region0: #{tpu_custom_call.1}
  #allocation0 [shape = 'u32[]', space=smem, size = 0x4, offset = 0x4, fixed_abs, tag = 'smem constant byte address 0x4 - core index']
  #allocation1 [shape = 'u32[72,128]{1,0:T(1,128)}', space=vmem, size = 0x9000, scoped, tag = 'internal scratch']
  #allocation2 [shape = 's32[1]{0:T(128)S(6)}', space=smem, size = 0x200, scoped, tag = 'scoped memory for tpu_custom_call.1']
  %s0 = inlined_call_operand.vmem [shape: f32[2], index: 0, kind: input, shape index: {}]
  %s1 = inlined_call_operand.<no memory space> [shape: s32[1], index: 1, kind: input, shape index: {}]
  %s2 = inlined_call_operand.hbm [shape: f32[16,128], index: 2, kind: input, shape index: {}]
  %s3 = inlined_call_operand.hbm [shape: f32[16,128], index: 3, kind: input, shape index: {}]
  %s4 = inlined_call_operand.hbm [shape: f32[1,16,128], index: 4, kind: output, shape index: {}]
  %s5 = sld [smem:[#allocation0]]
  $region50: #{tpu_custom_call.1} parent=0
    _
  %s7 = ssub.s32 1, %s5
  %s8 = scalar_select 0, %s7, %s5
  %9 = sst [smem:[#allocation2]] %s1
  $region1: #{tpu_custom_call.1} parent=0
    #allocation3 [shape = 'u8[512]{0}', space=smem, size = 0x200, scoped, tag = 'input window, operand 0, single buffered']
    #allocation4 [shape = 's32[1]{0}', space=sflag, size = 0x4, scoped, tag = 'scoped memory for tpu_custom_call.1']
    #allocation5 [shape = 's32[1]{0}', space=sflag, size = 0x4, scoped, tag = 'scoped memory for tpu_custom_call.1']
    #allocation6 [shape = 's32[1]{0}', space=sflag, size = 0x4, scoped, tag = 'scoped memory for tpu_custom_call.1']
    #allocation7 [shape = 'u8[8192]{0}', space=vmem, size = 0x2000, scoped, tag = 'input window, operand 2, single buffered']
    #allocation8 [shape = 'u8[8192]{0}', space=vmem, size = 0x2000, scoped, tag = 'input window, operand 3, single buffered']
    #allocation9 [shape = 's32[1]{0}', space=sflag, size = 0x4, scoped, tag = 'scoped memory for tpu_custom_call.1']
    #allocation10 [shape = 'u8[8192]{0}', space=vmem, size = 0x2000, scoped, tag = 'output window, operand 0, single buffered']
    %10 = vsyncpa [#allocation6], 0
    %11 = vsyncpa [#allocation4], 0
    %12 = vsyncpa [#allocation9], 0
    %13 = vsyncpa [#allocation5], 0
    // Predicated region
    $region2: #{tpu_custom_call.1} parent=1 // pred_check
      _
    $region3: #{tpu_custom_call.1} parent=1 // pred_check_branch
      %15 = sbr.rel (0) target = $region5
    $region4: #{tpu_custom_call.1} parent=1 // pred_region
      %17 = vsyncadd [#allocation6], 0
      %s19 = sshll.u32 %s0, 4
      %s20 = int_to_ptr.vmem [resolvable:$true] %s19
      %22 = dma.vmem_to_smem %s20, 16, [#allocation3], [#allocation6]
    $region5: #{tpu_custom_call.1} parent=1 // pred_fallthru
      _
    // Predicated region
    $region6: #{tpu_custom_call.1} parent=1 // pred_check
      _
    $region7: #{tpu_custom_call.1} parent=1 // pred_check_branch
      %24 = sbr.rel (0) target = $region9
    $region8: #{tpu_custom_call.1} parent=1 // pred_region
      _
    $region9: #{tpu_custom_call.1} parent=1 // pred_fallthru
      _
    // Predicated region
    $region10: #{tpu_custom_call.1} parent=1 // pred_check
      _
    $region11: #{tpu_custom_call.1} parent=1 // pred_check_branch
      %26 = sbr.rel (0) target = $region13
    $region12: #{tpu_custom_call.1} parent=1 // pred_region
      %s27 = sadd.s32 0, 0
      %p28 = scmp.lt.s32.totalorder %s27, 0
      %s29 = scalar_select %p28, %s27, 0
      %s30 = smul.u32 2, %s29
      %32 = vsyncadd [#allocation4], 0
      %s33 = smul.addr %s30, 8
      %s34 = scalar_lea.hbm %s2, %s33
      %s35 = sshll.u32 %s34, 4
      %s36 = int_to_ptr.hbm [resolvable:$true] %s35
      %s37 = sshll.u32 [#allocation7], 4
      %s38 = int_to_ptr.vmem [resolvable:$true] %s37
      %43 = dma.hbm_to_vmem [thread:$0]  %s36, 256, %s38, [#allocation4], 128, 128, 8
    $region13: #{tpu_custom_call.1} parent=1 // pred_fallthru
      _
    // Predicated region
    $region14: #{tpu_custom_call.1} parent=1 // pred_check
      _
    $region15: #{tpu_custom_call.1} parent=1 // pred_check_branch
      %45 = sbr.rel (0) target = $region17
    $region16: #{tpu_custom_call.1} parent=1 // pred_region
      %s46 = sadd.s32 0, 0
      %p47 = scmp.lt.s32.totalorder %s46, 0
      %s48 = scalar_select %p47, %s46, 0
      %s49 = smul.u32 2, %s48
      %51 = vsyncadd [#allocation9], 0
      %s52 = smul.addr %s49, 8
      %s53 = scalar_lea.hbm %s3, %s52
      %s54 = sshll.u32 %s53, 4
      %s55 = int_to_ptr.hbm [resolvable:$true] %s54
      %s56 = sshll.u32 [#allocation8], 4
      %s57 = int_to_ptr.vmem [resolvable:$true] %s56
      %62 = dma.hbm_to_vmem [thread:$0]  %s55, 256, %s57, [#allocation9], 128, 128, 8
    $region17: #{tpu_custom_call.1} parent=1 // pred_fallthru
      _
    // Predicated region
    $region18: #{tpu_custom_call.1} parent=1 // pred_check
      _
    $region19: #{tpu_custom_call.1} parent=1 // pred_check_branch
      %64 = sbr.rel (0) target = $region21
    $region20: #{tpu_custom_call.1} parent=1 // pred_region
      %66 = dma.done [#allocation6], 16
    $region21: #{tpu_custom_call.1} parent=1 // pred_fallthru
      _
    // Predicated region
    $region22: #{tpu_custom_call.1} parent=1 // pred_check
      _
    $region23: #{tpu_custom_call.1} parent=1 // pred_check_branch
      %68 = sbr.rel (0) target = $region25
    $region24: #{tpu_custom_call.1} parent=1 // pred_region
      %70 = dma.done [#allocation4], 256
    $region25: #{tpu_custom_call.1} parent=1 // pred_fallthru
      _
    // Predicated region
    $region26: #{tpu_custom_call.1} parent=1 // pred_check
      _
    $region27: #{tpu_custom_call.1} parent=1 // pred_check_branch
      %72 = sbr.rel (0) target = $region29
    $region28: #{tpu_custom_call.1} parent=1 // pred_region
      %74 = dma.done [#allocation9], 256
    $region29: #{tpu_custom_call.1} parent=1 // pred_fallthru
      _
    %75 = sfence
    %s76 = sadd.s32 0, 0
    %p77 = scmp.lt.s32.totalorder %s76, 0
    %s78 = scalar_select %p77, %s76, 0
    %s79 = smul.u32 2, %s78
    %s80 = sadd.s32 0, 0
    %p81 = scmp.lt.s32.totalorder %s80, 0
    %s82 = scalar_select %p81, %s80, 0
    %s83 = smul.u32 2, %s82
    %p84 = scmp.eq.s32.totalorder 0, 0
    // Predicated region
    $region30: #{tpu_custom_call.1} parent=1 // pred_check
      %p85 = pneg %p84
    $region31: #{tpu_custom_call.1} parent=1 // pred_check_branch
      %87 = sbr.rel (%p85) target = $region33
    $region32: #{tpu_custom_call.1} parent=1 // pred_region
      %88 = vst [vmem:[#allocation10] sm:$0xff] 0.0
      %89 = vst [vmem:[#allocation10 + $0x8] sm:$0xff] 0.0
    $region33: #{tpu_custom_call.1} parent=1 // pred_fallthru
      _
    %s90 = sld [smem:[#allocation3]]
    %s91 = sld [smem:[#allocation3 + $0x1]]
    %v92 = vld [vmem:[#allocation7] sm:$0xff]
    %v93 = vld [vmem:[#allocation7 + $0x8] sm:$0xff]
    %v94 = vmax.f32 %v92, -0.99
    %v95 = vmax.f32 %v93, -0.99
    %v96 = vmin.f32 %v94, 0.99
    %v97 = vmin.f32 %v95, 0.99
    %v98 = vsub.f32 1.0, %v96
    %v99 = vsub.f32 1.0, %v97
    %v100 = vadd.f32 %v96, 1.0
    %v101 = vadd.f32 %v97, 1.0
    %v102 = vrcp.pop %v100
    %v103 = vmul.f32 %v100, %v102
    %v104 = vsub.f32 1.0, %v103
    %v105 = vmul.f32 %v102, %v104
    %v106 = vadd.f32 %v102, %v105
    %vm107 = vweird.f32 %v100
    %vm108 = vweird.f32 %v102
    %vm109 = vmor %vm107, %vm108
    %v110 = vsel %vm109, %v102, %v106
    %v111 = vand.u32 2147483647, %v100
    %vm112 = vcmp.eq.f32.partialorder %v111, 8.507059e+37
    %v113 = vand.u32 %v100, 2147483648
    %v114 = vor.u32 1.1754944e-38, %v113
    %v115 = vsel %vm112, %v114, %v110
    %v116 = vmul.f32 %v98, %v115
    %v117 = vrcp.pop %v101
    %v118 = vmul.f32 %v101, %v117
    %v119 = vsub.f32 1.0, %v118
    %v120 = vmul.f32 %v117, %v119
    %v121 = vadd.f32 %v117, %v120
    %vm122 = vweird.f32 %v101
    %vm123 = vweird.f32 %v117
    %vm124 = vmor %vm122, %vm123
    %v125 = vsel %vm124, %v117, %v121
    %v126 = vand.u32 2147483647, %v101
    %vm127 = vcmp.eq.f32.partialorder %v126, 8.507059e+37
    %v128 = vand.u32 %v101, 2147483648
    %v129 = vor.u32 1.1754944e-38, %v128
    %v130 = vsel %vm127, %v129, %v125
    %v131 = vmul.f32 %v99, %v130
    %v132 = vlog2.pop %v116
    %v133 = vmul.f32 %v132, 0.6931472
    %v134 = vlog2.pop %v131
    %v135 = vmul.f32 %v134, 0.6931472
    %v136 = vstv %s90
    %v137 = vmul.f32 %v136, %v133
    %v138 = vmul.f32 %v136, %v135
    %v139 = vstv %s91
    %v140 = vsub.f32 %v137, %v139
    %v141 = vsub.f32 %v138, %v139
    %v142 = vtanh.pop %v140
    %v143 = vtanh.pop %v141
    %v144 = vmul.f32 %v142, 0.5
    %v145 = vmul.f32 %v143, 0.5
    %v146 = vsub.f32 0.5, %v144
    %v147 = vsub.f32 0.5, %v145
    %v148 = vld [vmem:[#allocation8] sm:$0xff]
    %v149 = vld [vmem:[#allocation8 + $0x8] sm:$0xff]
    %v150 = vsub.f32 %v146, %v148
    %v151 = vsub.f32 %v147, %v149
    %v152 = vmul.f32 %v150, %v150
    %v153 = vmul.f32 %v151, %v151
    %s154 = sld [smem:[#allocation2]]
    %s155 = sadd.s32 0, 0
    %s156 = smul.u32 %s155, 2048
    %s157 = ssub.s32 %s154, %s156
    %p158 = scmp.ge.s32.totalorder %s157, 2048
    // Predicated region
    $region34: #{tpu_custom_call.1} parent=1 // pred_check
      %p159 = pneg %p158
    $region35: #{tpu_custom_call.1} parent=1 // pred_check_branch
      %161 = sbr.rel (%p159) target = $region37
    $region36: #{tpu_custom_call.1} parent=1 // pred_region
      %v162 = vld [vmem:[#allocation10] sm:$0xff]
      %v163 = vld [vmem:[#allocation10 + $0x8] sm:$0xff]
      %v164 = vadd.f32 %v162, %v152
      %v165 = vadd.f32 %v163, %v153
      %166 = vst [vmem:[#allocation10] sm:$0xff] %v164
      %167 = vst [vmem:[#allocation10 + $0x8] sm:$0xff] %v165
    $region37: #{tpu_custom_call.1} parent=1 // pred_fallthru
      _
    %p168 = scmp.lt.s32.totalorder %s157, 2048
    // Predicated region
    $region38: #{tpu_custom_call.1} parent=1 // pred_check
      %p169 = pneg %p168
    $region39: #{tpu_custom_call.1} parent=1 // pred_check_branch
      %171 = sbr.rel (%p169) target = $region41
    $region40: #{tpu_custom_call.1} parent=1 // pred_region
      %v172 = vlaneseq
      %v173 = vshrl.u32 %v172, 7
      %v174 = vadd.s32 %v173, 8
      %v175 = vmul.u32 %v173, 128
      %v176 = vmul.u32 %v174, 128
      %v177 = vlaneseq
      %v178 = vand.u32 %v177, 127
      %v179 = vadd.s32 %v175, %v178
      %v180 = vadd.s32 %v176, %v178
      %v181 = vstv %s157
      %vm182 = vcmp.lt.s32.totalorder %v179, %v181
      %vm183 = vcmp.lt.s32.totalorder %v180, %v181
      %v184 = vsel %vm182, %v152, 0.0
      %v185 = vsel %vm183, %v153, 0.0
      %v186 = vld [vmem:[#allocation10] sm:$0xff]
      %v187 = vld [vmem:[#allocation10 + $0x8] sm:$0xff]
      %v188 = vadd.f32 %v186, %v184
      %v189 = vadd.f32 %v187, %v185
      %190 = vst [vmem:[#allocation10] sm:$0xff] %v188
      %191 = vst [vmem:[#allocation10 + $0x8] sm:$0xff] %v189
    $region41: #{tpu_custom_call.1} parent=1 // pred_fallthru
      _
    // Predicated region
    $region42: #{tpu_custom_call.1} parent=1 // pred_check
      _
    $region43: #{tpu_custom_call.1} parent=1 // pred_check_branch
      %193 = sbr.rel (0) target = $region45
    $region44: #{tpu_custom_call.1} parent=1 // pred_region
      %195 = vsyncadd [#allocation5], 0
      %s196 = sshll.u32 [#allocation10], 4
      %s197 = int_to_ptr.vmem [resolvable:$true] %s196
      %s198 = sshll.u32 %s4, 4
      %s199 = int_to_ptr.hbm [resolvable:$true] %s198
      %204 = dma.vmem_to_hbm [thread:$0]  %s197, 256, %s199, [#allocation5], 128, 128, 8
    $region45: #{tpu_custom_call.1} parent=1 // pred_fallthru
      _
    // Predicated region
    $region46: #{tpu_custom_call.1} parent=1 // pred_check
      _
    $region47: #{tpu_custom_call.1} parent=1 // pred_check_branch
      %206 = sbr.rel (0) target = $region49
    $region48: #{tpu_custom_call.1} parent=1 // pred_region
      %208 = dma.done [#allocation5], 256
    $region49: #{tpu_custom_call.1} parent=1 // pred_fallthru
      _
    %209 = vsyncpa [#allocation4], 1
    %210 = vsyncpa [#allocation9], 1
    %211 = vsyncpa [#allocation5], 1
    %212 = vsyncpa [#allocation6], 1

</llo_original>
